<compile_context>
chip_gen: v5e
topology: v5e:2x2
jax: 0.10.0
libtpu: 0.0.40
codegen_flags: <defaults>
</compile_context>

<pallas_src>
import jax
import jax.numpy as jnp
import numpy as np
from jax.experimental import pallas as pl
from jax.experimental.pallas import tpu as pltpu


def gnn_critic_kernel(a_ref, x_ref, w1_ref, w2_ref, wfc_ref, pk_ref, add_ref,
                      out_ref):
    """One batch chunk (TB graphs) per grid step; batch folded into lanes."""
    A = a_ref[...]               # (N, N)        shared normalized adjacency
    X = x_ref[0]                 # (N, TB*Din)   node features, per-graph blocks
    W1 = w1_ref[...]             # (TB*Din, TB*H) block-diag conv1 weight
    W2 = w2_ref[...]             # (TB*H, TB*H)   block-diag conv2 weight
    WFC = wfc_ref[...]           # (TB*H, TB)     block-diag fc hidden weight
    b1 = pk_ref[0:1, :]          # (1, TB*H)
    b2 = pk_ref[1:2, :]          # (1, TB*H)
    wfc_a = pk_ref[2:3, 0:1]     # (1, 1)  fc weight for additional feature
    bfc = pk_ref[2:3, 1:2]       # (1, 1)  fc bias
    add = add_ref[0]             # (1, TB) additional features for this chunk

    # GCNConv 1 + ReLU
    h = jnp.dot(X, W1, preferred_element_type=jnp.float32)
    h = jnp.maximum(jnp.dot(A, h, preferred_element_type=jnp.float32) + b1, 0.0)
    # GCNConv 2 + ReLU
    h = jnp.dot(h, W2, preferred_element_type=jnp.float32)
    h = jnp.maximum(jnp.dot(A, h, preferred_element_type=jnp.float32) + b2, 0.0)
    # fc (hidden part) then mean over nodes: linear ops commute, and the mean
    # is a sublane reduce on the (otherwise idle) XLU — no pooling matrix DMA.
    val = jnp.mean(jnp.dot(h, WFC, preferred_element_type=jnp.float32),
                   axis=0, keepdims=True)                      # (1, TB)
    out_ref[0] = val + add * wfc_a + bfc                       # (1, TB) store


def gnn_critic_forward(a_hat, graph_nodes, additional_features, params):
    """graph_nodes: [B, N, Din] f32, additional_features: [B, 1] f32 -> [B, 1]."""
    B, N, Din = graph_nodes.shape
    H = params["w1"].shape[1]
    f32 = jnp.float32

    # Batch-chunk parallel grid: 2 chunks feed both TensorCores on v7x; on
    # v5e/v6e (1 TC) it is just a cheap 2-step sequential grid.
    C = 2 if (B >= 2 and B % 2 == 0) else 1
    TB = B // C
    TBD, TBH = TB * Din, TB * H

    def blkdiag(w, reps):
        return w if reps == 1 else jnp.kron(jnp.eye(reps, dtype=w.dtype), w)

    # (C, N, TB*Din): chunk-major, node rows, per-graph feature blocks in lanes.
    x_c = (graph_nodes.astype(f32)
           .reshape(C, TB, N, Din).transpose(0, 2, 1, 3).reshape(C, N, TBD))
    add_c = additional_features.astype(f32).reshape(C, TB, 1).transpose(0, 2, 1)

    w1c = blkdiag(params["w1"].astype(f32), TB)          # (TBD, TBH)
    w2c = blkdiag(params["w2"].astype(f32), TB)          # (TBH, TBH)
    wfcc = blkdiag(params["wfc_h"].astype(f32).T, TB)    # (TBH, TB)

    # Packed small operands: 1 DMA for b1/b2/fc-scalars, built without scatters.
    scal = jnp.concatenate([params["wfc_a"].astype(f32),
                            params["bfc"].astype(f32)], axis=1)        # (1, 2)
    pk = jnp.concatenate([
        jnp.tile(params["b1"].astype(f32), (1, TB)),
        jnp.tile(params["b2"].astype(f32), (1, TB)),
        jnp.pad(scal, ((0, 0), (0, TBH - 2))),
    ], axis=0)                                                         # (3, TBH)

    const2d = lambda shape: pl.BlockSpec(shape, lambda i: (0, 0))

    out = pl.pallas_call(
        gnn_critic_kernel,
        out_shape=jax.ShapeDtypeStruct((C, 1, TB), f32),
        grid=(C,),
        in_specs=[
            const2d((N, N)),                                   # A_hat
            pl.BlockSpec((1, N, TBD), lambda i: (i, 0, 0)),    # node features
            const2d((TBD, TBH)),                               # conv1 weight
            const2d((TBH, TBH)),                               # conv2 weight
            const2d((TBH, TB)),                                # fc hidden weight
            const2d((3, TBH)),                                 # packed biases/scalars
            pl.BlockSpec((1, 1, TB), lambda i: (i, 0, 0)),     # additional feats
        ],
        out_specs=pl.BlockSpec((1, 1, TB), lambda i: (i, 0, 0)),
        compiler_params=pltpu.CompilerParams(
            dimension_semantics=("parallel",)),
    )(a_hat.astype(f32), x_c, w1c, w2c, wfcc, pk, add_c)
    return out.reshape(B, 1)


def build_normalized_adjacency(edge_index, num_nodes):
    """PyG GCNConv normalization: A_hat = D^-1/2 (A + I) D^-1/2 (dense)."""
    src, dst = edge_index
    A = jnp.zeros((num_nodes, num_nodes), jnp.float32).at[dst, src].add(1.0)
    A_tilde = A + jnp.eye(num_nodes, dtype=jnp.float32)
    deg = A_tilde.sum(axis=1)
    dinv = 1.0 / jnp.sqrt(deg)
    return dinv[:, None] * A_tilde * dinv[None, :]


def reference_forward(a_hat, x, add, p):
    h = jnp.maximum(jnp.einsum("nm,bmh->bnh", a_hat, x @ p["w1"]) + p["b1"], 0.0)
    h = jnp.maximum(jnp.einsum("nm,bmh->bnh", a_hat, h @ p["w2"]) + p["b2"], 0.0)
    pooled = h.mean(axis=1)                                     # [B, H]
    cat = jnp.concatenate([pooled, add], axis=1)                # [B, H+1]
    w_full = jnp.concatenate([p["wfc_h"], p["wfc_a"]], axis=1)  # [1, H+1]
    return cat @ w_full.T + p["bfc"]                            # [B, 1]


if __name__ == "__main__":
    B, N, INPUT_DIM, HIDDEN = 2, 16, 4, 32

    key = jax.random.PRNGKey(0)
    k_x, k_add, k_w1, k_b1, k_w2, k_b2, k_fc, k_fcb = jax.random.split(key, 8)

    # Synthetic batched graph observation (same edge structure for every graph,
    # matching the reference module which takes edge_index from batch index 0).
    graph_nodes = jax.random.normal(k_x, (B, N, INPUT_DIM), jnp.float32)
    additional_features = jax.random.normal(k_add, (B, 1), jnp.float32)

    # Deterministic undirected ring graph: i <-> (i+1) % N
    src = np.concatenate([np.arange(N), (np.arange(N) + 1) % N])
    dst = np.concatenate([(np.arange(N) + 1) % N, np.arange(N)])
    edge_index = jnp.asarray(np.stack([src, dst]), jnp.int32)   # [2, 2N]

    a_hat = build_normalized_adjacency(edge_index, N)

    # Deterministic parameter init (GCNConv weights/biases + final Linear).
    params = {
        "w1": 0.1 * jax.random.normal(k_w1, (INPUT_DIM, HIDDEN), jnp.float32),
        "b1": 0.1 * jax.random.normal(k_b1, (1, HIDDEN), jnp.float32),
        "w2": 0.1 * jax.random.normal(k_w2, (HIDDEN, HIDDEN), jnp.float32),
        "b2": 0.1 * jax.random.normal(k_b2, (1, HIDDEN), jnp.float32),
    }
    fc_w = 0.1 * jax.random.normal(k_fc, (1, HIDDEN + 1), jnp.float32)
    params["wfc_h"] = fc_w[:, :HIDDEN]          # (1, H)
    params["wfc_a"] = fc_w[:, HIDDEN:]          # (1, 1)
    params["bfc"] = 0.1 * jax.random.normal(k_fcb, (1, 1), jnp.float32)

    forward = jax.jit(gnn_critic_forward)       # fuses the tiny host-side prep
    out = jax.block_until_ready(
        forward(a_hat, graph_nodes, additional_features, params))

    ref = reference_forward(a_hat, graph_nodes, additional_features, params)
    assert out.shape == (B, 1)
    assert np.allclose(np.asarray(out), np.asarray(ref), rtol=1e-5, atol=1e-5)

    print("KERNEL_OK")
</pallas_src>

<mosaic_0001>
module attributes {stable_mosaic.version = 11 : i64} {
  func.func @gnn_critic_kernel(%arg0: i32, %arg1: memref<16x16xf32, #tpu.memory_space<vmem>>, %arg2: memref<1x16x4xf32, #tpu.memory_space<vmem>>, %arg3: memref<4x32xf32, #tpu.memory_space<vmem>>, %arg4: memref<32x32xf32, #tpu.memory_space<vmem>>, %arg5: memref<32x1xf32, #tpu.memory_space<vmem>>, %arg6: memref<3x32xf32, #tpu.memory_space<vmem>>, %arg7: memref<1x1x1xf32, #tpu.memory_space<vmem>>, %arg8: memref<1x1x1xf32, #tpu.memory_space<vmem>>) attributes {dimension_semantics = [#tpu.dimension_semantics<parallel>], iteration_bounds = array<i64: 2>, scalar_prefetch = 0 : i64, scratch_operands = 0 : i64, tpu.core_type = #tpu.core_type<tc>, window_params = [{pipeline_mode = #tpu.pipeline_mode<synchronous>, transform_indices = @transform_0, window_bounds = array<i64: 16, 16>}, {transform_indices = @transform_1, window_bounds = array<i64: 1, 16, 4>}, {pipeline_mode = #tpu.pipeline_mode<synchronous>, transform_indices = @transform_2, window_bounds = array<i64: 4, 32>}, {pipeline_mode = #tpu.pipeline_mode<synchronous>, transform_indices = @transform_3, window_bounds = array<i64: 32, 32>}, {pipeline_mode = #tpu.pipeline_mode<synchronous>, transform_indices = @transform_4, window_bounds = array<i64: 32, 1>}, {pipeline_mode = #tpu.pipeline_mode<synchronous>, transform_indices = @transform_5, window_bounds = array<i64: 3, 32>}, {transform_indices = @transform_6, window_bounds = array<i64: 1, 1, 1>}, {transform_indices = @transform_7, window_bounds = array<i64: 1, 1, 1>}]} {
    %c0 = arith.constant 0 : index
    %c0_0 = arith.constant 0 : index
    %0 = vector.load %arg1[%c0, %c0_0] : memref<16x16xf32, #tpu.memory_space<vmem>>, vector<16x16xf32>
    %c0_1 = arith.constant 0 : index
    %c0_2 = arith.constant 0 : index
    %c0_3 = arith.constant 0 : index
    %1 = vector.load %arg2[%c0_1, %c0_2, %c0_3] : memref<1x16x4xf32, #tpu.memory_space<vmem>>, vector<1x16x4xf32>
    %2 = vector.shape_cast %1 : vector<1x16x4xf32> to vector<16x4xf32>
    %c0_4 = arith.constant 0 : index
    %c0_5 = arith.constant 0 : index
    %3 = vector.load %arg3[%c0_4, %c0_5] : memref<4x32xf32, #tpu.memory_space<vmem>>, vector<4x32xf32>
    %c0_6 = arith.constant 0 : index
    %c0_7 = arith.constant 0 : index
    %4 = vector.load %arg4[%c0_6, %c0_7] : memref<32x32xf32, #tpu.memory_space<vmem>>, vector<32x32xf32>
    %c0_8 = arith.constant 0 : index
    %c0_9 = arith.constant 0 : index
    %5 = vector.load %arg5[%c0_8, %c0_9] : memref<32x1xf32, #tpu.memory_space<vmem>>, vector<32x1xf32>
    %c0_10 = arith.constant 0 : index
    %c0_11 = arith.constant 0 : index
    %6 = vector.load %arg6[%c0_10, %c0_11] : memref<3x32xf32, #tpu.memory_space<vmem>>, vector<1x32xf32>
    %c1 = arith.constant 1 : index
    %c0_12 = arith.constant 0 : index
    %7 = vector.load %arg6[%c1, %c0_12] : memref<3x32xf32, #tpu.memory_space<vmem>>, vector<1x32xf32>
    %c2 = arith.constant 2 : index
    %c0_13 = arith.constant 0 : index
    %8 = vector.load %arg6[%c2, %c0_13] : memref<3x32xf32, #tpu.memory_space<vmem>>, vector<1x1xf32>
    %c2_14 = arith.constant 2 : index
    %c1_15 = arith.constant 1 : index
    %9 = vector.load %arg6[%c2_14, %c1_15] : memref<3x32xf32, #tpu.memory_space<vmem>>, vector<1x1xf32>
    %c0_16 = arith.constant 0 : index
    %c0_17 = arith.constant 0 : index
    %c0_18 = arith.constant 0 : index
    %10 = vector.load %arg7[%c0_16, %c0_17, %c0_18] : memref<1x1x1xf32, #tpu.memory_space<vmem>>, vector<1x1x1xf32>
    %11 = vector.shape_cast %10 : vector<1x1x1xf32> to vector<1x1xf32>
    %cst = arith.constant dense<0.000000e+00> : vector<16x32xf32>
    %12 = tpu.matmul %2, %3, %cst {dimension_numbers = #tpu.dot_dimension_numbers<[1], [0], [0], [1], [0, 0, 1, 1], [], []>} : vector<16x4xf32>, vector<4x32xf32>, vector<16x32xf32> -> vector<16x32xf32>
    %cst_19 = arith.constant dense<0.000000e+00> : vector<16x32xf32>
    %13 = tpu.matmul %0, %12, %cst_19 {dimension_numbers = #tpu.dot_dimension_numbers<[1], [0], [0], [1], [0, 0, 1, 1], [], []>} : vector<16x16xf32>, vector<16x32xf32>, vector<16x32xf32> -> vector<16x32xf32>
    %14 = vector.broadcast %6 : vector<1x32xf32> to vector<16x32xf32>
    %15 = arith.addf %13, %14 : vector<16x32xf32>
    %cst_20 = arith.constant 0.000000e+00 : f32
    %16 = vector.broadcast %cst_20 : f32 to vector<16x32xf32>
    %17 = arith.maximumf %15, %16 : vector<16x32xf32>
    %cst_21 = arith.constant dense<0.000000e+00> : vector<16x32xf32>
    %18 = tpu.matmul %17, %4, %cst_21 {dimension_numbers = #tpu.dot_dimension_numbers<[1], [0], [0], [1], [0, 0, 1, 1], [], []>} : vector<16x32xf32>, vector<32x32xf32>, vector<16x32xf32> -> vector<16x32xf32>
    %cst_22 = arith.constant dense<0.000000e+00> : vector<16x32xf32>
    %19 = tpu.matmul %0, %18, %cst_22 {dimension_numbers = #tpu.dot_dimension_numbers<[1], [0], [0], [1], [0, 0, 1, 1], [], []>} : vector<16x16xf32>, vector<16x32xf32>, vector<16x32xf32> -> vector<16x32xf32>
    %20 = vector.broadcast %7 : vector<1x32xf32> to vector<16x32xf32>
    %21 = arith.addf %19, %20 : vector<16x32xf32>
    %cst_23 = arith.constant 0.000000e+00 : f32
    %22 = vector.broadcast %cst_23 : f32 to vector<16x32xf32>
    %23 = arith.maximumf %21, %22 : vector<16x32xf32>
    %cst_24 = arith.constant dense<0.000000e+00> : vector<16x1xf32>
    %24 = tpu.matmul %23, %5, %cst_24 {dimension_numbers = #tpu.dot_dimension_numbers<[1], [0], [0], [1], [0, 0, 1, 1], [], []>} : vector<16x32xf32>, vector<32x1xf32>, vector<16x1xf32> -> vector<16x1xf32>
    %cst_25 = arith.constant dense<0.000000e+00> : vector<1xf32>
    %25 = vector.multi_reduction <add>, %24, %cst_25 [0] : vector<16x1xf32> to vector<1xf32>
    %26 = vector.shape_cast %25 : vector<1xf32> to vector<1x1xf32>
    %cst_26 = arith.constant 1.600000e+01 : f32
    %27 = vector.broadcast %cst_26 : f32 to vector<1x1xf32>
    %28 = arith.divf %26, %27 : vector<1x1xf32>
    %29 = arith.mulf %11, %8 : vector<1x1xf32>
    %30 = arith.addf %28, %29 : vector<1x1xf32>
    %31 = arith.addf %30, %9 : vector<1x1xf32>
    %c0_27 = arith.constant 0 : index
    %c0_28 = arith.constant 0 : index
    %c0_29 = arith.constant 0 : index
    %32 = vector.load %arg8[%c0_27, %c0_28, %c0_29] : memref<1x1x1xf32, #tpu.memory_space<vmem>>, vector<1x1x1xf32>
    %33 = vector.shape_cast %32 : vector<1x1x1xf32> to vector<1x1xf32>
    %34 = vector.shape_cast %31 : vector<1x1xf32> to vector<1x1x1xf32>
    tpu.vector_store %arg8[%c0_27, %c0_28, %c0_29], %34 {strides = array<i32>} : memref<1x1x1xf32, #tpu.memory_space<vmem>>, vector<1x1x1xf32>,
    return
  }
  func.func @transform_0(%arg0: i32) -> (i32, i32) {
    %c0_i32 = arith.constant 0 : i32
    %c0_i32_0 = arith.constant 0 : i32
    %c0_i32_1 = arith.constant 0 : i32
    return %c0_i32, %c0_i32_0 : i32, i32
  }
  func.func @transform_1(%arg0: i32) -> (i32, i32, i32) {
    %c0_i32 = arith.constant 0 : i32
    %c0_i32_0 = arith.constant 0 : i32
    %c0_i32_1 = arith.constant 0 : i32
    return %arg0, %c0_i32, %c0_i32_0 : i32, i32, i32
  }
  func.func @transform_2(%arg0: i32) -> (i32, i32) {
    %c0_i32 = arith.constant 0 : i32
    %c0_i32_0 = arith.constant 0 : i32
    %c0_i32_1 = arith.constant 0 : i32
    return %c0_i32, %c0_i32_0 : i32, i32
  }
  func.func @transform_3(%arg0: i32) -> (i32, i32) {
    %c0_i32 = arith.constant 0 : i32
    %c0_i32_0 = arith.constant 0 : i32
    %c0_i32_1 = arith.constant 0 : i32
    return %c0_i32, %c0_i32_0 : i32, i32
  }
  func.func @transform_4(%arg0: i32) -> (i32, i32) {
    %c0_i32 = arith.constant 0 : i32
    %c0_i32_0 = arith.constant 0 : i32
    %c0_i32_1 = arith.constant 0 : i32
    return %c0_i32, %c0_i32_0 : i32, i32
  }
  func.func @transform_5(%arg0: i32) -> (i32, i32) {
    %c0_i32 = arith.constant 0 : i32
    %c0_i32_0 = arith.constant 0 : i32
    %c0_i32_1 = arith.constant 0 : i32
    return %c0_i32, %c0_i32_0 : i32, i32
  }
  func.func @transform_6(%arg0: i32) -> (i32, i32, i32) {
    %c0_i32 = arith.constant 0 : i32
    %c0_i32_0 = arith.constant 0 : i32
    %c0_i32_1 = arith.constant 0 : i32
    return %arg0, %c0_i32, %c0_i32_0 : i32, i32, i32
  }
  func.func @transform_7(%arg0: i32) -> (i32, i32, i32) {
    %c0_i32 = arith.constant 0 : i32
    %c0_i32_0 = arith.constant 0 : i32
    %c0_i32_1 = arith.constant 0 : i32
    return %arg0, %c0_i32, %c0_i32_0 : i32, i32, i32
  }
}

</mosaic_0001>

<llo_original>
// kernel: gnn_critic_forward.1
$region0: #{gnn_critic_forward.1}
  #allocation0 [shape = 'u32[]', space=smem, size = 0x4, offset = 0x4, fixed_abs, tag = 'smem constant byte address 0x4 - core index']
  #allocation1 [shape = 'u32[72,128]{1,0:T(1,128)}', space=vmem, size = 0x9000, scoped, tag = 'internal scratch']
  %s0 = inlined_call_operand.vmem [shape: f32[16,16], index: 0, kind: input, shape index: {}]
  %s1 = inlined_call_operand.vmem [shape: f32[2,16,4], index: 1, kind: input, shape index: {}]
  %s2 = inlined_call_operand.vmem [shape: f32[4,32], index: 2, kind: input, shape index: {}]
  %s3 = inlined_call_operand.vmem [shape: f32[32,32], index: 3, kind: input, shape index: {}]
  %s4 = inlined_call_operand.vmem [shape: f32[32,1], index: 4, kind: input, shape index: {}]
  %s5 = inlined_call_operand.vmem [shape: f32[3,32], index: 5, kind: input, shape index: {}]
  %s6 = inlined_call_operand.vmem [shape: f32[2,1,1], index: 6, kind: input, shape index: {}]
  %s7 = inlined_call_operand.vmem [shape: f32[2,1,1], index: 7, kind: output, shape index: {}]
  %s8 = sld [smem:[#allocation0]]
  $region61: #{gnn_critic_forward.1} parent=0
    _
  %s10 = ssub.s32 1, %s8
  %s11 = scalar_select 0, %s10, %s8
  loop: start=0, step=1, limit=4
  $region2: #{gnn_critic_forward.1} parent=0 // loop_pre_header
    _
  $region3: #{gnn_critic_forward.1} parent=0 // loop_header
    %s13 = sphi 0, %s17
    %p14 = scmp.ge.s32.totalorder %s13, 4
    %s21 = sphi 0, %s21
    %s23 = sphi 0, %s21
    %s24 = sphi 0, %s23
    %s38 = sphi 0, %s24
    %s44 = sphi 0, %s46
    %s47 = sphi 0, %s44
    %s48 = sphi 0, %s47
    %s64 = sphi 0, %s48
    %s68 = sphi 0, %s68
    %s70 = sphi 0, %s68
    %s71 = sphi 0, %s70
    %s85 = sphi 0, %s71
    %s89 = sphi 0, %s89
    %s91 = sphi 0, %s89
    %s92 = sphi 0, %s91
    %s106 = sphi 0, %s92
    %s110 = sphi 0, %s110
    %s112 = sphi 0, %s110
    %s113 = sphi 0, %s112
    %s127 = sphi 0, %s113
    %s131 = sphi 0, %s131
    %s133 = sphi 0, %s131
    %s134 = sphi 0, %s133
    %s148 = sphi 0, %s134
    %s154 = sphi 0, %s156
    %s157 = sphi 0, %s154
    %s158 = sphi 0, %s157
    %s174 = sphi 0, %s158
    %s180 = sphi 0, %s182
    %s183 = sphi 0, %s180
    %s184 = sphi 0, %s183
    %s200 = sphi 0, %s184
  $region4: #{gnn_critic_forward.1} parent=0 // loop_header_branch
    %16 = sbr.rel (%p14) target = $region8
  $region5: #{gnn_critic_forward.1} parent=0 // loop_body
    %s18 = ssub.s32 %s13, 1
    %s19 = ssub.s32 %s13, 2
    %s20 = sadd.s32 %s13, 1
    %s22 = sadd.s32 %s21, 1
    %p25 = scmp.eq.s32.totalorder %s13, 1
    %p26 = scmp.ne.s32.totalorder %s21, %s23
    %p27 = scmp.eq.s32.totalorder %s13, 0
    %p28 = por %p26, %p27
    %p29 = scmp.ne.s32.totalorder %s21, %s23
    %p30 = scmp.eq.s32.totalorder %s18, 1
    %p31 = por %p29, %p30
    %p32 = scmp.ne.s32.totalorder %s23, %s24
    %p33 = scmp.eq.s32.totalorder %s18, 0
    %p34 = por %p32, %p33
    %p35 = scmp.ne.s32.totalorder %s23, %s24
    %p36 = scmp.eq.s32.totalorder %s19, 1
    %p37 = por %p35, %p36
    %p39 = scmp.ne.s32.totalorder %s24, %s38
    %p40 = scmp.eq.s32.totalorder %s19, 0
    %p41 = por %p39, %p40
    %s42 = ssub.s32 %s13, %s20
    %p43 = scmp.eq.s32.totalorder %s42, 0
    %s45 = sadd.s32 %s44, 1
    %s46 = scalar_select %p43, %s44, %s45
    %p49 = pneg %p43
    %p50 = scmp.eq.s32.totalorder %s13, 1
    %p51 = por %p49, %p50
    %p52 = scmp.ne.s32.totalorder %s44, %s47
    %p53 = scmp.eq.s32.totalorder %s13, 0
    %p54 = por %p52, %p53
    %p55 = scmp.ne.s32.totalorder %s44, %s47
    %p56 = scmp.eq.s32.totalorder %s18, 1
    %p57 = por %p55, %p56
    %p58 = scmp.ne.s32.totalorder %s47, %s48
    %p59 = scmp.eq.s32.totalorder %s18, 0
    %p60 = por %p58, %p59
    %p61 = scmp.ne.s32.totalorder %s47, %s48
    %p62 = scmp.eq.s32.totalorder %s19, 1
    %p63 = por %p61, %p62
    %p65 = scmp.ne.s32.totalorder %s48, %s64
    %p66 = scmp.eq.s32.totalorder %s19, 0
    %p67 = por %p65, %p66
    %s69 = sadd.s32 %s68, 1
    %p72 = scmp.eq.s32.totalorder %s13, 1
    %p73 = scmp.ne.s32.totalorder %s68, %s70
    %p74 = scmp.eq.s32.totalorder %s13, 0
    %p75 = por %p73, %p74
    %p76 = scmp.ne.s32.totalorder %s68, %s70
    %p77 = scmp.eq.s32.totalorder %s18, 1
    %p78 = por %p76, %p77
    %p79 = scmp.ne.s32.totalorder %s70, %s71
    %p80 = scmp.eq.s32.totalorder %s18, 0
    %p81 = por %p79, %p80
    %p82 = scmp.ne.s32.totalorder %s70, %s71
    %p83 = scmp.eq.s32.totalorder %s19, 1
    %p84 = por %p82, %p83
    %p86 = scmp.ne.s32.totalorder %s71, %s85
    %p87 = scmp.eq.s32.totalorder %s19, 0
    %p88 = por %p86, %p87
    %s90 = sadd.s32 %s89, 1
    %p93 = scmp.eq.s32.totalorder %s13, 1
    %p94 = scmp.ne.s32.totalorder %s89, %s91
    %p95 = scmp.eq.s32.totalorder %s13, 0
    %p96 = por %p94, %p95
    %p97 = scmp.ne.s32.totalorder %s89, %s91
    %p98 = scmp.eq.s32.totalorder %s18, 1
    %p99 = por %p97, %p98
    %p100 = scmp.ne.s32.totalorder %s91, %s92
    %p101 = scmp.eq.s32.totalorder %s18, 0
    %p102 = por %p100, %p101
    %p103 = scmp.ne.s32.totalorder %s91, %s92
    %p104 = scmp.eq.s32.totalorder %s19, 1
    %p105 = por %p103, %p104
    %p107 = scmp.ne.s32.totalorder %s92, %s106
    %p108 = scmp.eq.s32.totalorder %s19, 0
    %p109 = por %p107, %p108
    %s111 = sadd.s32 %s110, 1
    %p114 = scmp.eq.s32.totalorder %s13, 1
    %p115 = scmp.ne.s32.totalorder %s110, %s112
    %p116 = scmp.eq.s32.totalorder %s13, 0
    %p117 = por %p115, %p116
    %p118 = scmp.ne.s32.totalorder %s110, %s112
    %p119 = scmp.eq.s32.totalorder %s18, 1
    %p120 = por %p118, %p119
    %p121 = scmp.ne.s32.totalorder %s112, %s113
    %p122 = scmp.eq.s32.totalorder %s18, 0
    %p123 = por %p121, %p122
    %p124 = scmp.ne.s32.totalorder %s112, %s113
    %p125 = scmp.eq.s32.totalorder %s19, 1
    %p126 = por %p124, %p125
    %p128 = scmp.ne.s32.totalorder %s113, %s127
    %p129 = scmp.eq.s32.totalorder %s19, 0
    %p130 = por %p128, %p129
    %s132 = sadd.s32 %s131, 1
    %p135 = scmp.eq.s32.totalorder %s13, 1
    %p136 = scmp.ne.s32.totalorder %s131, %s133
    %p137 = scmp.eq.s32.totalorder %s13, 0
    %p138 = por %p136, %p137
    %p139 = scmp.ne.s32.totalorder %s131, %s133
    %p140 = scmp.eq.s32.totalorder %s18, 1
    %p141 = por %p139, %p140
    %p142 = scmp.ne.s32.totalorder %s133, %s134
    %p143 = scmp.eq.s32.totalorder %s18, 0
    %p144 = por %p142, %p143
    %p145 = scmp.ne.s32.totalorder %s133, %s134
    %p146 = scmp.eq.s32.totalorder %s19, 1
    %p147 = por %p145, %p146
    %p149 = scmp.ne.s32.totalorder %s134, %s148
    %p150 = scmp.eq.s32.totalorder %s19, 0
    %p151 = por %p149, %p150
    %s152 = ssub.s32 %s13, %s20
    %p153 = scmp.eq.s32.totalorder %s152, 0
    %s155 = sadd.s32 %s154, 1
    %s156 = scalar_select %p153, %s154, %s155
    %p159 = pneg %p153
    %p160 = scmp.eq.s32.totalorder %s13, 1
    %p161 = por %p159, %p160
    %p162 = scmp.ne.s32.totalorder %s154, %s157
    %p163 = scmp.eq.s32.totalorder %s13, 0
    %p164 = por %p162, %p163
    %p165 = scmp.ne.s32.totalorder %s154, %s157
    %p166 = scmp.eq.s32.totalorder %s18, 1
    %p167 = por %p165, %p166
    %p168 = scmp.ne.s32.totalorder %s157, %s158
    %p169 = scmp.eq.s32.totalorder %s18, 0
    %p170 = por %p168, %p169
    %p171 = scmp.ne.s32.totalorder %s157, %s158
    %p172 = scmp.eq.s32.totalorder %s19, 1
    %p173 = por %p171, %p172
    %p175 = scmp.ne.s32.totalorder %s158, %s174
    %p176 = scmp.eq.s32.totalorder %s19, 0
    %p177 = por %p175, %p176
    %s178 = ssub.s32 %s13, %s20
    %p179 = scmp.eq.s32.totalorder %s178, 0
    %s181 = sadd.s32 %s180, 1
    %s182 = scalar_select %p179, %s180, %s181
    %p185 = pneg %p179
    %p186 = scmp.eq.s32.totalorder %s13, 1
    %p187 = por %p185, %p186
    %p188 = scmp.ne.s32.totalorder %s180, %s183
    %p189 = scmp.eq.s32.totalorder %s13, 0
    %p190 = por %p188, %p189
    %p191 = scmp.ne.s32.totalorder %s180, %s183
    %p192 = scmp.eq.s32.totalorder %s18, 1
    %p193 = por %p191, %p192
    %p194 = scmp.ne.s32.totalorder %s183, %s184
    %p195 = scmp.eq.s32.totalorder %s18, 0
    %p196 = por %p194, %p195
    %p197 = scmp.ne.s32.totalorder %s183, %s184
    %p198 = scmp.eq.s32.totalorder %s19, 1
    %p199 = por %p197, %p198
    %p201 = scmp.ne.s32.totalorder %s184, %s200
    %p202 = scmp.eq.s32.totalorder %s19, 0
    %p203 = por %p201, %p202
    %p204 = scmp.le.s32.totalorder 1, %s13
    %p205 = scmp.lt.s32.totalorder %s13, 3
    %p206 = pnand %p204, %p205
    %p207 = pneg %p206
    // Predicated region
    $region9: #{gnn_critic_forward.1} parent=5 // pred_check
      _
    $region10: #{gnn_critic_forward.1} parent=5 // pred_check_branch
      %209 = sbr.rel (%p206) target = $region12
    $region11: #{gnn_critic_forward.1} parent=5 // pred_region
      %s210 = ssub.s32 %s13, 1
      // Predicated region
      $region13: #{gnn_critic_forward.1} parent=11 // pred_check
        %p211 = pneg %p34
      $region14: #{gnn_critic_forward.1} parent=11 // pred_check_branch
        %213 = sbr.rel (%p211) target = $region16
      $region15: #{gnn_critic_forward.1} parent=11 // pred_region
        _
      $region16: #{gnn_critic_forward.1} parent=11 // pred_fallthru
        _
      // Predicated region
      $region17: #{gnn_critic_forward.1} parent=11 // pred_check
        %p214 = pneg %p81
      $region18: #{gnn_critic_forward.1} parent=11 // pred_check_branch
        %216 = sbr.rel (%p214) target = $region20
      $region19: #{gnn_critic_forward.1} parent=11 // pred_region
        _
      $region20: #{gnn_critic_forward.1} parent=11 // pred_fallthru
        _
      // Predicated region
      $region21: #{gnn_critic_forward.1} parent=11 // pred_check
        %p217 = pneg %p102
      $region22: #{gnn_critic_forward.1} parent=11 // pred_check_branch
        %219 = sbr.rel (%p217) target = $region24
      $region23: #{gnn_critic_forward.1} parent=11 // pred_region
        _
      $region24: #{gnn_critic_forward.1} parent=11 // pred_fallthru
        _
      // Predicated region
      $region25: #{gnn_critic_forward.1} parent=11 // pred_check
        %p220 = pneg %p123
      $region26: #{gnn_critic_forward.1} parent=11 // pred_check_branch
        %222 = sbr.rel (%p220) target = $region28
      $region27: #{gnn_critic_forward.1} parent=11 // pred_region
        _
      $region28: #{gnn_critic_forward.1} parent=11 // pred_fallthru
        _
      // Predicated region
      $region29: #{gnn_critic_forward.1} parent=11 // pred_check
        %p223 = pneg %p144
      $region30: #{gnn_critic_forward.1} parent=11 // pred_check_branch
        %225 = sbr.rel (%p223) target = $region32
      $region31: #{gnn_critic_forward.1} parent=11 // pred_region
        _
      $region32: #{gnn_critic_forward.1} parent=11 // pred_fallthru
        _
    $region12: #{gnn_critic_forward.1} parent=5 // pred_fallthru
      _
    %p226 = scmp.lt.s32.totalorder %s13, 2
    // Predicated region
    $region33: #{gnn_critic_forward.1} parent=5 // pred_check
      %p227 = pneg %p226
    $region34: #{gnn_critic_forward.1} parent=5 // pred_check_branch
      %229 = sbr.rel (%p227) target = $region36
    $region35: #{gnn_critic_forward.1} parent=5 // pred_region
      // Predicated region
      $region37: #{gnn_critic_forward.1} parent=35 // pred_check
        %p230 = pneg %p54
      $region38: #{gnn_critic_forward.1} parent=35 // pred_check_branch
        %232 = sbr.rel (%p230) target = $region40
      $region39: #{gnn_critic_forward.1} parent=35 // pred_region
        %p233 = scmp.lt.s32.totalorder %s13, 1
        %s234 = scalar_select %p233, %s13, 1
        %s235 = smul.addr %s234, 2
        %s236 = smul.addr %s235, 8
        %s237 = scalar_lea.vmem %s1, %s236
      $region40: #{gnn_critic_forward.1} parent=35 // pred_fallthru
        _
      // Predicated region
      $region41: #{gnn_critic_forward.1} parent=35 // pred_check
        %p238 = pneg %p164
      $region42: #{gnn_critic_forward.1} parent=35 // pred_check_branch
        %240 = sbr.rel (%p238) target = $region44
      $region43: #{gnn_critic_forward.1} parent=35 // pred_region
        %p241 = scmp.lt.s32.totalorder %s13, 1
        %s242 = scalar_select %p241, %s13, 1
        %s243 = scalar_lea.vmem %s6, %s242
      $region44: #{gnn_critic_forward.1} parent=35 // pred_fallthru
        _
    $region36: #{gnn_critic_forward.1} parent=5 // pred_fallthru
      _
    %p244 = scmp.le.s32.totalorder 1, %s13
    %p245 = scmp.lt.s32.totalorder %s13, 3
    %p246 = pnand %p244, %p245
    %p247 = pneg %p246
    // Predicated region
    $region45: #{gnn_critic_forward.1} parent=5 // pred_check
      _
    $region46: #{gnn_critic_forward.1} parent=5 // pred_check_branch
      %249 = sbr.rel (%p246) target = $region48
    $region47: #{gnn_critic_forward.1} parent=5 // pred_region
      %s250 = ssub.s32 %s13, 1
      %p251 = pneg %p34
      %p252 = pneg %p31
      %p253 = scmp.lt.s32.totalorder %s18, 1
      %s254 = scalar_select %p253, %s18, 1
      %s255 = smul.addr %s254, 2
      %s256 = smul.addr %s255, 8
      %s257 = scalar_lea.vmem %s1, %s256
      %p258 = pneg %p60
      %p259 = pneg %p57
      %p260 = pneg %p81
      %p261 = pneg %p78
      %p262 = pneg %p102
      %p263 = pneg %p99
      %p264 = pneg %p123
      %p265 = pneg %p120
      %p266 = pneg %p144
      %p267 = pneg %p141
      %p268 = scmp.lt.s32.totalorder %s18, 1
      %s269 = scalar_select %p268, %s18, 1
      %s270 = scalar_lea.vmem %s6, %s269
      %p271 = pneg %p170
      %p272 = pneg %p167
      %p273 = pneg %p196
      %p274 = pneg %p193
      %p275 = scmp.lt.s32.totalorder %s18, 1
      %s276 = scalar_select %p275, %s18, 1
      %s277 = scalar_lea.vmem %s7, %s276
      %p278 = scmp.lt.s32.totalorder %s18, 1
      %s279 = scalar_select %p278, %s18, 1
      %s280 = smul.addr %s279, 2
      %s281 = smul.addr %s280, 8
      %s282 = scalar_lea.vmem %s1, %s281
      %p283 = scmp.lt.s32.totalorder %s18, 1
      %s284 = scalar_select %p283, %s18, 1
      %s285 = scalar_lea.vmem %s6, %s284
      %p286 = scmp.lt.s32.totalorder %s18, 1
      %s287 = scalar_select %p286, %s18, 1
      %s288 = scalar_lea.vmem %s7, %s287
      %v289 = vld [vmem:[%s0] sm:$0xff]
      %v290 = vld [vmem:[%s0 + $0x8] sm:$0xff]
      %v291 = vld [vmem:[%s282] sm:$0xff]
      %v292 = vld [vmem:[%s282 + $0x8] sm:$0xff]
      %v293 = vld [vmem:[%s2] sm:$0xf]
      %v294 = vld [vmem:[%s3] sm:$0xff]
      %v295 = vld [vmem:[%s3 + $0x8] sm:$0xff]
      %v296 = vld [vmem:[%s3 + $0x10] sm:$0xff]
      %v297 = vld [vmem:[%s3 + $0x18] sm:$0xff]
      %v298 = vld [vmem:[%s4] sm:$0xff]
      %v299 = vld [vmem:[%s4 + $0x8] sm:$0xff]
      %v300 = vld [vmem:[%s4 + $0x10] sm:$0xff]
      %v301 = vld [vmem:[%s4 + $0x18] sm:$0xff]
      %v302 = vld [vmem:[%s5] sm:$0x1]
      %v303 = vld [vmem:[%s5 + $0x1] sm:$0x1]
      %v304 = vld [vmem:[%s5 + $0x2] sm:$0x1]
      %v305 = vld [vmem:[%s285] sm:$0x1]
      %vm306 = vcmask 31744
      %v308 = vsel %vm306, %v291, 0
      %v311 = vsel %vm306, %v292, 0
      %vm313 = vcmask 1043456
      %v315 = vsel %vm313, %v293, 0
      %317 = vmatpush.msra.mxu0 0.0
      %318 = vmatpush.msra.mxu0 0.0
      %319 = vmatpush.msra.mxu0 0.0
      %320 = vmatpush.msra.mxu0 0.0
      %321 = vmatpush.msra.mxu0 0.0
      %322 = vmatpush.msra.mxu0 0.0
      %323 = vmatpush.msra.mxu0 0.0
      %324 = vmatpush.msra.mxu0 0.0
      %325 = vmatpush.msra.mxu0 0.0
      %326 = vmatpush.msra.mxu0 0.0
      %327 = vmatpush.msra.mxu0 0.0
      %328 = vmatpush.msra.mxu0 0.0
      %329 = vmatpush.msra.mxu0 0.0
      %330 = vmatpush.msra.mxu0 0.0
      %331 = vmatpush.msra.mxu0 0.0
      %332 = vmatpush.msra.mxu0 %v315
      %333 = vmatmul.f32.gmra.mxu0 %v308
      %v334 = vpop.f32.mrf.mxu0
      %v335 = vadd.f32 0.0, %v334
      %336 = vmatmul.f32.gmra.mxu0 %v311
      %v337 = vpop.f32.mrf.mxu0
      %v338 = vadd.f32 0.0, %v337
      %339 = vdwg.mxu0
      %v340 = vperm.slane %v302, 0
      %vm341 = vcmask 130048
      %v343 = vsel %vm341, %v289, 0
      %v346 = vsel %vm341, %v290, 0
      %348 = vmatpush.msra.mxu0 0.0
      %349 = vmatpush.msra.mxu0 0.0
      %350 = vmatpush.msra.mxu0 0.0
      %351 = vmatpush.msra.mxu0 0.0
      %352 = vmatpush.msra.mxu0 0.0
      %353 = vmatpush.msra.mxu0 0.0
      %354 = vmatpush.msra.mxu0 0.0
      %355 = vmatpush.msra.mxu0 0.0
      %356 = vmatpush.msra.mxu0 0.0
      %357 = vmatpush.msra.mxu0 0.0
      %358 = vmatpush.msra.mxu0 0.0
      %359 = vmatpush.msra.mxu0 0.0
      %360 = vmatpush.msra.mxu0 0.0
      %361 = vmatpush.msra.mxu0 0.0
      %362 = vmatpush.msra.mxu0 %v338
      %363 = vmatpush.msra.mxu0 %v335
      %364 = vmatmul.f32.gmra.mxu0 %v343
      %v365 = vpop.f32.mrf.mxu0
      %v366 = vadd.f32 %v340, %v365
      %367 = vmatmul.f32.gmra.mxu0 %v346
      %v368 = vpop.f32.mrf.mxu0
      %v369 = vadd.f32 %v340, %v368
      %370 = vdwg.mxu0
      %v371 = vmax.f32 %v366, 0.0
      %v372 = vmax.f32 %v369, 0.0
      %vm373 = vcmask 261120
      %v375 = vsel %vm373, %v371, 0
      %v378 = vsel %vm373, %v372, 0
      %380 = vmatpush.msra.mxu0 0.0
      %381 = vmatpush.msra.mxu0 0.0
      %382 = vmatpush.msra.mxu0 0.0
      %383 = vmatpush.msra.mxu0 0.0
      %384 = vmatpush.msra.mxu0 0.0
      %385 = vmatpush.msra.mxu0 0.0
      %386 = vmatpush.msra.mxu0 0.0
      %387 = vmatpush.msra.mxu0 0.0
      %388 = vmatpush.msra.mxu0 0.0
      %389 = vmatpush.msra.mxu0 0.0
      %390 = vmatpush.msra.mxu0 0.0
      %391 = vmatpush.msra.mxu0 0.0
      %392 = vmatpush.msra.mxu0 %v297
      %393 = vmatpush.msra.mxu0 %v296
      %394 = vmatpush.msra.mxu0 %v295
      %395 = vmatpush.msra.mxu0 %v294
      %396 = vmatmul.f32.gmra.mxu0 %v375
      %v397 = vpop.f32.mrf.mxu0
      %v398 = vadd.f32 0.0, %v397
      %399 = vmatmul.f32.gmra.mxu0 %v378
      %v400 = vpop.f32.mrf.mxu0
      %v401 = vadd.f32 0.0, %v400
      %402 = vdwg.mxu0
      %v403 = vperm.slane %v303, 0
      %404 = vmatpush.msra.mxu0 0.0
      %405 = vmatpush.msra.mxu0 0.0
      %406 = vmatpush.msra.mxu0 0.0
      %407 = vmatpush.msra.mxu0 0.0
      %408 = vmatpush.msra.mxu0 0.0
      %409 = vmatpush.msra.mxu0 0.0
      %410 = vmatpush.msra.mxu0 0.0
      %411 = vmatpush.msra.mxu0 0.0
      %412 = vmatpush.msra.mxu0 0.0
      %413 = vmatpush.msra.mxu0 0.0
      %414 = vmatpush.msra.mxu0 0.0
      %415 = vmatpush.msra.mxu0 0.0
      %416 = vmatpush.msra.mxu0 0.0
      %417 = vmatpush.msra.mxu0 0.0
      %418 = vmatpush.msra.mxu0 %v401
      %419 = vmatpush.msra.mxu0 %v398
      %420 = vmatmul.f32.gmra.mxu0 %v343
      %v421 = vpop.f32.mrf.mxu0
      %v422 = vadd.f32 %v403, %v421
      %423 = vmatmul.f32.gmra.mxu0 %v346
      %v424 = vpop.f32.mrf.mxu0
      %v425 = vadd.f32 %v403, %v424
      %426 = vdwg.mxu0
      %v427 = vmax.f32 %v422, 0.0
      %v428 = vmax.f32 %v425, 0.0
      %v430 = vsel %vm373, %v427, 0
      %v433 = vsel %vm373, %v428, 0
      %435 = vmatpush.msra.mxu0 0.0
      %436 = vmatpush.msra.mxu0 0.0
      %437 = vmatpush.msra.mxu0 0.0
      %438 = vmatpush.msra.mxu0 0.0
      %439 = vmatpush.msra.mxu0 0.0
      %440 = vmatpush.msra.mxu0 0.0
      %441 = vmatpush.msra.mxu0 0.0
      %442 = vmatpush.msra.mxu0 0.0
      %443 = vmatpush.msra.mxu0 0.0
      %444 = vmatpush.msra.mxu0 0.0
      %445 = vmatpush.msra.mxu0 0.0
      %446 = vmatpush.msra.mxu0 0.0
      %447 = vmatpush.msra.mxu0 %v301
      %448 = vmatpush.msra.mxu0 %v300
      %449 = vmatpush.msra.mxu0 %v299
      %450 = vmatpush.msra.mxu0 %v298
      %451 = vmatmul.f32.gmra.mxu0 %v430
      %v452 = vpop.f32.mrf.mxu0
      %v453 = vadd.f32 0.0, %v452
      %454 = vmatmul.f32.gmra.mxu0 %v433
      %v455 = vpop.f32.mrf.mxu0
      %v456 = vadd.f32 0.0, %v455
      %457 = vdwg.mxu0
      %vm458 = vcmask 7168
      %v459 = vsel %vm458, %v453, 0.0
      %v460 = vsel %vm458, %v456, 0.0
      %v461 = vadd.f32 %v459, %v460
      %v462 = vrot.slane %v461, 4
      %v463 = vadd.f32 %v461, %v462
      %v464 = vrot.slane %v463, 2
      %v465 = vadd.f32 %v463, %v464
      %v466 = vrot.slane %v465, 1
      %v467 = vadd.f32 %v465, %v466
      %v468 = vrcp.pop 16.0
      %v469 = vmul.f32 16.0, %v468
      %v470 = vsub.f32 1.0, %v469
      %v471 = vmul.f32 %v468, %v470
      %v472 = vadd.f32 %v468, %v471
      %vm473 = vweird.f32 %v468
      %v474 = vsel %vm473, %v468, %v472
      %v475 = vmul.f32 %v467, %v474
      %v476 = vmul.f32 %v305, %v304
      %v477 = vadd.f32 %v475, %v476
      %479 = vrot.lane.b32.xlu0 %v304, 127
      %v480 = vpop.permute.xlu0 %479
      %v482 = vadd.f32 %v477, %v480
      %vm483 = vcmask 0
      %484 = vst.msk [vmem:[%s288] sm:$0x1] %vm483, %v482
      %p485 = scmp.lt.s32.totalorder %s18, 1
      %s486 = scalar_select %p485, %s18, 1
      %s487 = scalar_lea.vmem %s7, %s486
      // Predicated region
      $region49: #{gnn_critic_forward.1} parent=47 // pred_check
        %p488 = pneg %p193
      $region50: #{gnn_critic_forward.1} parent=47 // pred_check_branch
        %490 = sbr.rel (%p488) target = $region52
      $region51: #{gnn_critic_forward.1} parent=47 // pred_region
        _
      $region52: #{gnn_critic_forward.1} parent=47 // pred_fallthru
        _
    $region48: #{gnn_critic_forward.1} parent=5 // pred_fallthru
      _
    %p491 = scmp.le.s32.totalorder 2, %s13
    // Predicated region
    $region53: #{gnn_critic_forward.1} parent=5 // pred_check
      %p492 = pneg %p491
    $region54: #{gnn_critic_forward.1} parent=5 // pred_check_branch
      %494 = sbr.rel (%p492) target = $region56
    $region55: #{gnn_critic_forward.1} parent=5 // pred_region
      %s495 = ssub.s32 %s13, 2
      // Predicated region
      $region57: #{gnn_critic_forward.1} parent=55 // pred_check
        %p496 = pneg %p199
      $region58: #{gnn_critic_forward.1} parent=55 // pred_check_branch
        %498 = sbr.rel (%p496) target = $region60
      $region59: #{gnn_critic_forward.1} parent=55 // pred_region
        %p499 = scmp.lt.s32.totalorder %s19, 1
        %s500 = scalar_select %p499, %s19, 1
        %s501 = scalar_lea.vmem %s7, %s500
      $region60: #{gnn_critic_forward.1} parent=55 // pred_fallthru
        _
    $region56: #{gnn_critic_forward.1} parent=5 // pred_fallthru
      _
  $region6: #{gnn_critic_forward.1} parent=0 // loop_footer
    %s17 = sadd.s32 1, %s13
  $region7: #{gnn_critic_forward.1} parent=0 // loop_footer_branch
    %12 = sbr.rel target = $region3
  $region8: #{gnn_critic_forward.1} parent=0 // loop_exit
    _

</llo_original>
